<compile_context>
chip_gen: v5e
topology: v5e:2x2
jax: 0.10.0
libtpu: 0.0.40
codegen_flags: <defaults>
</compile_context>

<pallas_src>
import functools
import math

import jax
import jax.numpy as jnp
from jax import lax
from jax.experimental import pallas as pl
from jax.experimental.pallas import tpu as pltpu

LANES = 512             # lane-dense last dim (multiple of 128)
MAX_BLOCK_ROWS = 2048   # 2048 x 512 x 4B = 4 MiB f32 per input per grid step
OVERHEAD_FLOOR_ROWS = 512  # >= ~1 MiB f32 per block keeps the 0.35us/step cost small


def _round_up(n, m):
    return ((n + m - 1) // m) * m


def _cdiv(a, b):
    return -(-a // b)


def _row_align(dtype):
    """Sublane block multiple required by the dtype packing (8/16/32 for 4/2/1 B)."""
    return max(8, 32 // jnp.dtype(dtype).itemsize)


def _pow_static(x, power):
    # Static dispatch on the (python) exponent so integer powers stay exact for
    # negative bases (matches torch.pow for integral exponents).
    p = float(power)
    if p == 1.0:
        return x
    if p.is_integer():
        return x ** int(p)
    # TODO(synk): fractional power of a negative numerator yields NaN (same as torch.pow).
    return x ** jnp.float32(p)


def _lane_fold(a):
    """(8, LANES) f32 -> (8, 128) by summing vreg-aligned 128-lane groups (no XLU)."""
    out = a[:, 0:128]
    for k in range(1, LANES // 128):
        out = out + a[:, k * 128:(k + 1) * 128]
    return out


def _make_kernel(chunk_rows, row_groups):
    """Kernel: reduce one (block_rows, LANES) block of x and y to two (1,8,128)
    partial-sum tiles: sum(x*y) and sum(y*y).  No carried state across steps."""

    def fold8(p):
        # (chunk_rows, LANES) -> (8, LANES); chunk_rows is a small multiple of 8.
        out = p[0:8]
        for k in range(1, chunk_rows // 8):
            out = out + p[k * 8:(k + 1) * 8]
        return out

    def kernel(x_ref, y_ref, xy_ref, yy_ref):
        def body(g, carry):
            acc_xy, acc_yy = carry
            r = pl.multiple_of(g * chunk_rows, chunk_rows)
            x = x_ref[pl.ds(r, chunk_rows), :].astype(jnp.float32)
            y = y_ref[pl.ds(r, chunk_rows), :].astype(jnp.float32)
            # Only small (chunk_rows, LANES) transients; accumulators live in vregs.
            return acc_xy + fold8(x * y), acc_yy + fold8(y * y)

        zero = jnp.zeros((8, LANES), jnp.float32)
        acc_xy, acc_yy = lax.fori_loop(0, row_groups, body, (zero, zero),
                                       unroll=min(8, row_groups))
        xy_ref[...] = _lane_fold(acc_xy).reshape(1, 8, 128)
        yy_ref[...] = _lane_fold(acc_yy).reshape(1, 8, 128)

    return kernel


def _auto_block_rows(sizes, align):
    """Pick block_rows balancing per-step pipeline overhead vs. per-pair padding."""
    pair_rows = [_cdiv(s, LANES) for s in sizes]
    largest = max(pair_rows)
    # (a) amortize the ~0.35 us/step pipeline overhead (aim for >= ~1 MiB f32 / block).
    overhead_floor = min(OVERHEAD_FLOOR_ROWS, largest)
    # (b) keep zero padding (< 1 block per pair) under ~25% of the real traffic.
    waste_cap = max(1, sum(pair_rows) // (4 * len(pair_rows)))
    rows = max(overhead_floor, min(waste_cap, MAX_BLOCK_ROWS))
    rows = min(rows, MAX_BLOCK_ROWS, _round_up(largest, align))
    return max(align, _round_up(rows, align))


def _group_partial_sums(xs_list, ys_list, block_rows=None):
    """Per-pair (sum(x*y), sum(y*y)) for pairs sharing storage dtypes, via one pallas_call."""
    x_dt = xs_list[0].dtype
    y_dt = ys_list[0].dtype
    sizes = [int(math.prod(x.shape)) for x in xs_list]
    align = max(_row_align(x_dt), _row_align(y_dt))
    if block_rows is None:
        block_rows = _auto_block_rows(sizes, align)
    else:
        block_rows = _round_up(int(block_rows), align)
    block_elems = block_rows * LANES

    # Pad each pair to whole blocks (zeros contribute 0 to both sums) and build
    # one lane-dense slab per input, in the pair's native storage dtype.
    x_chunks, y_chunks, blocks_per_pair = [], [], []
    for x, y, n in zip(xs_list, ys_list, sizes):
        padded = _round_up(n, block_elems)
        x_chunks.append(jnp.pad(x.reshape(-1), (0, padded - n)))
        y_chunks.append(jnp.pad(y.reshape(-1), (0, padded - n)))
        blocks_per_pair.append(padded // block_elems)

    xs = jnp.concatenate(x_chunks).reshape(-1, LANES)
    ys = jnp.concatenate(y_chunks).reshape(-1, LANES)
    num_blocks = sum(blocks_per_pair)

    kernel = _make_kernel(chunk_rows=align, row_groups=block_rows // align)

    out_xy, out_yy = pl.pallas_call(
        kernel,
        out_shape=(jax.ShapeDtypeStruct((num_blocks, 8, 128), jnp.float32),
                   jax.ShapeDtypeStruct((num_blocks, 8, 128), jnp.float32)),
        grid=(num_blocks,),
        in_specs=[
            pl.BlockSpec((block_rows, LANES), lambda i: (i, 0)),
            pl.BlockSpec((block_rows, LANES), lambda i: (i, 0)),
        ],
        out_specs=(
            pl.BlockSpec((1, 8, 128), lambda i: (i, 0, 0)),
            pl.BlockSpec((1, 8, 128), lambda i: (i, 0, 0)),
        ),
        compiler_params=pltpu.CompilerParams(
            dimension_semantics=("parallel",),      # both TCs on v7x; neutral on v5e/v6e
            vmem_limit_bytes=32 * 1024 * 1024,
        ),
    )(xs, ys)

    # Tiny wrapper-side epilogue: per-block scalars then a static segment-sum per pair.
    blk_xy = out_xy.reshape(num_blocks, -1).sum(axis=1)
    blk_yy = out_yy.reshape(num_blocks, -1).sum(axis=1)
    nums, yys, off = [], [], 0
    for nb in blocks_per_pair:
        nums.append(blk_xy[off:off + nb].sum())
        yys.append(blk_yy[off:off + nb].sum())
        off += nb
    return nums, yys


def caricature_loss(layer_outputs, ideal_layer_outputs, power=1.0, eps=1e-6,
                    block_rows=None):
    """Pallas equivalent of CaricatureLoss(power).forward(layer_outputs, ideal_layer_outputs)."""
    assert len(layer_outputs) == len(ideal_layer_outputs)
    assert len(layer_outputs) > 0

    # Match torch's y.detach(): gradients never flow into the ideal activations.
    ideal = [lax.stop_gradient(y) for y in ideal_layer_outputs]
    for x, y in zip(layer_outputs, ideal):
        # TODO(synk): resize_4d_tensor_by_size branch (shape mismatch) not implemented.
        assert x.shape == y.shape, "shapes must match"

    # Group pairs by storage dtypes so bf16 layers are never up-cast in HBM.
    groups = {}
    for x, y in zip(layer_outputs, ideal):
        key = (jnp.dtype(x.dtype), jnp.dtype(y.dtype))
        groups.setdefault(key, ([], []))
        groups[key][0].append(x)
        groups[key][1].append(y)

    total = jnp.float32(0.0)
    for xs_list, ys_list in groups.values():
        nums, yys = _group_partial_sums(xs_list, ys_list, block_rows=block_rows)
        for num, yy in zip(nums, yys):
            den = jnp.sqrt(yy) + jnp.float32(eps)
            cossim = jnp.maximum(jnp.float32(0.1), num / den)
            total = total + (-(cossim * _pow_static(num, power)))
    return total


def _reference(layer_outputs, ideal_layer_outputs, power=1.0, eps=1e-6):
    total = jnp.float32(0.0)
    for x, y in zip(layer_outputs, ideal_layer_outputs):
        x = x.astype(jnp.float32)
        y = y.astype(jnp.float32)
        num = jnp.sum(x * y)
        den = jnp.sqrt(jnp.sum(y * y)) + eps
        cossim = jnp.maximum(jnp.float32(0.1), num / den)
        total = total + (-(cossim * _pow_static(num, power)))
    return total


if __name__ == "__main__":
    key = jax.random.PRNGKey(0)
    ks = jax.random.split(key, 10)

    # Five "layers" of NCHW activations (small shapes, mixed dtypes).
    x1 = jax.random.normal(ks[0], (2, 4, 16, 16), dtype=jnp.float32)
    y1 = jax.random.normal(ks[1], (2, 4, 16, 16), dtype=jnp.float32)
    x2 = jax.random.normal(ks[2], (2, 8, 8, 8), dtype=jnp.float32)
    y2 = jax.random.normal(ks[3], (2, 8, 8, 8), dtype=jnp.float32)
    x3 = jax.random.normal(ks[4], (1, 8, 48, 48), dtype=jnp.float32)
    y3 = jax.random.normal(ks[5], (1, 8, 48, 48), dtype=jnp.float32)
    x4 = jax.random.normal(ks[6], (2, 4, 8, 8), dtype=jnp.bfloat16)
    y4 = jax.random.normal(ks[7], (2, 4, 8, 8), dtype=jnp.bfloat16)
    x5 = jax.random.normal(ks[8], (1, 4, 12, 12), dtype=jnp.float32)
    y5 = jax.random.normal(ks[9], (1, 4, 12, 12), dtype=jnp.bfloat16)

    layer_outputs = [x1, x2, x3, x4, x5]
    ideal_layer_outputs = [y1, y2, y3, y4, y5]

    ref = jax.block_until_ready(_reference(layer_outputs, ideal_layer_outputs, power=1.0))

    # Fused kernel, auto block size.
    out = jax.block_until_ready(caricature_loss(layer_outputs, ideal_layer_outputs, power=1.0))
    assert jnp.allclose(out, ref, rtol=1e-4, atol=1e-3), (out, ref)

    # Force a small block to also exercise multiple grid steps per layer pair.
    out_small = jax.block_until_ready(
        caricature_loss(layer_outputs, ideal_layer_outputs, power=1.0, block_rows=32))
    assert jnp.allclose(out_small, ref, rtol=1e-4, atol=1e-3), (out_small, ref)

    print("KERNEL_OK")
</pallas_src>

<mosaic_0001>
module attributes {stable_mosaic.version = 11 : i64} {
  func.func @kernel(%arg0: i32, %arg1: memref<40x512xf32, #tpu.memory_space<vmem>>, %arg2: memref<40x512xf32, #tpu.memory_space<vmem>>, %arg3: memref<1x8x128xf32, #tpu.memory_space<vmem>>, %arg4: memref<1x8x128xf32, #tpu.memory_space<vmem>>) attributes {dimension_semantics = [#tpu.dimension_semantics<parallel>], iteration_bounds = array<i64: 3>, scalar_prefetch = 0 : i64, scratch_operands = 0 : i64, tpu.core_type = #tpu.core_type<tc>, window_params = [{transform_indices = @transform_0, window_bounds = array<i64: 40, 512>}, {transform_indices = @transform_1, window_bounds = array<i64: 40, 512>}, {transform_indices = @transform_2, window_bounds = array<i64: 1, 8, 128>}, {transform_indices = @transform_3, window_bounds = array<i64: 1, 8, 128>}]} {
    %cst = arith.constant 0.000000e+00 : f32
    %0 = vector.broadcast %cst : f32 to vector<8x512xf32>
    %c0_i32 = arith.constant 0 : i32
    %c8_i32 = arith.constant 8 : i32
    %1 = arith.muli %c0_i32, %c8_i32 : i32
    %2 = tpu.assume_multiple %1, 8 : i32
    %3 = arith.index_cast %2 : i32 to index
    %c0 = arith.constant 0 : index
    %4 = vector.load %arg1[%3, %c0] : memref<40x512xf32, #tpu.memory_space<vmem>>, vector<8x512xf32>
    %5 = arith.index_cast %2 : i32 to index
    %c0_0 = arith.constant 0 : index
    %6 = vector.load %arg2[%5, %c0_0] : memref<40x512xf32, #tpu.memory_space<vmem>>, vector<8x512xf32>
    %7 = arith.mulf %4, %6 : vector<8x512xf32>
    %8 = arith.addf %0, %7 : vector<8x512xf32>
    %9 = arith.mulf %6, %6 : vector<8x512xf32>
    %10 = arith.addf %0, %9 : vector<8x512xf32>
    %c1_i32 = arith.constant 1 : i32
    %c8_i32_1 = arith.constant 8 : i32
    %11 = arith.muli %c1_i32, %c8_i32_1 : i32
    %12 = tpu.assume_multiple %11, 8 : i32
    %13 = arith.index_cast %12 : i32 to index
    %c0_2 = arith.constant 0 : index
    %14 = vector.load %arg1[%13, %c0_2] : memref<40x512xf32, #tpu.memory_space<vmem>>, vector<8x512xf32>
    %15 = arith.index_cast %12 : i32 to index
    %c0_3 = arith.constant 0 : index
    %16 = vector.load %arg2[%15, %c0_3] : memref<40x512xf32, #tpu.memory_space<vmem>>, vector<8x512xf32>
    %17 = arith.mulf %14, %16 : vector<8x512xf32>
    %18 = arith.addf %8, %17 : vector<8x512xf32>
    %19 = arith.mulf %16, %16 : vector<8x512xf32>
    %20 = arith.addf %10, %19 : vector<8x512xf32>
    %c2_i32 = arith.constant 2 : i32
    %c8_i32_4 = arith.constant 8 : i32
    %21 = arith.muli %c2_i32, %c8_i32_4 : i32
    %22 = tpu.assume_multiple %21, 8 : i32
    %23 = arith.index_cast %22 : i32 to index
    %c0_5 = arith.constant 0 : index
    %24 = vector.load %arg1[%23, %c0_5] : memref<40x512xf32, #tpu.memory_space<vmem>>, vector<8x512xf32>
    %25 = arith.index_cast %22 : i32 to index
    %c0_6 = arith.constant 0 : index
    %26 = vector.load %arg2[%25, %c0_6] : memref<40x512xf32, #tpu.memory_space<vmem>>, vector<8x512xf32>
    %27 = arith.mulf %24, %26 : vector<8x512xf32>
    %28 = arith.addf %18, %27 : vector<8x512xf32>
    %29 = arith.mulf %26, %26 : vector<8x512xf32>
    %30 = arith.addf %20, %29 : vector<8x512xf32>
    %c3_i32 = arith.constant 3 : i32
    %c8_i32_7 = arith.constant 8 : i32
    %31 = arith.muli %c3_i32, %c8_i32_7 : i32
    %32 = tpu.assume_multiple %31, 8 : i32
    %33 = arith.index_cast %32 : i32 to index
    %c0_8 = arith.constant 0 : index
    %34 = vector.load %arg1[%33, %c0_8] : memref<40x512xf32, #tpu.memory_space<vmem>>, vector<8x512xf32>
    %35 = arith.index_cast %32 : i32 to index
    %c0_9 = arith.constant 0 : index
    %36 = vector.load %arg2[%35, %c0_9] : memref<40x512xf32, #tpu.memory_space<vmem>>, vector<8x512xf32>
    %37 = arith.mulf %34, %36 : vector<8x512xf32>
    %38 = arith.addf %28, %37 : vector<8x512xf32>
    %39 = arith.mulf %36, %36 : vector<8x512xf32>
    %40 = arith.addf %30, %39 : vector<8x512xf32>
    %c4_i32 = arith.constant 4 : i32
    %c8_i32_10 = arith.constant 8 : i32
    %41 = arith.muli %c4_i32, %c8_i32_10 : i32
    %42 = tpu.assume_multiple %41, 8 : i32
    %43 = arith.index_cast %42 : i32 to index
    %c0_11 = arith.constant 0 : index
    %44 = vector.load %arg1[%43, %c0_11] : memref<40x512xf32, #tpu.memory_space<vmem>>, vector<8x512xf32>
    %45 = arith.index_cast %42 : i32 to index
    %c0_12 = arith.constant 0 : index
    %46 = vector.load %arg2[%45, %c0_12] : memref<40x512xf32, #tpu.memory_space<vmem>>, vector<8x512xf32>
    %47 = arith.mulf %44, %46 : vector<8x512xf32>
    %48 = arith.addf %38, %47 : vector<8x512xf32>
    %49 = arith.mulf %46, %46 : vector<8x512xf32>
    %50 = arith.addf %40, %49 : vector<8x512xf32>
    %c5_i32 = arith.constant 5 : i32
    %51 = vector.extract_strided_slice %48 {offsets = [0, 0], sizes = [8, 128], strides = [1, 1]} : vector<8x512xf32> to vector<8x128xf32>
    %52 = vector.extract_strided_slice %48 {offsets = [0, 128], sizes = [8, 128], strides = [1, 1]} : vector<8x512xf32> to vector<8x128xf32>
    %53 = arith.addf %51, %52 : vector<8x128xf32>
    %54 = vector.extract_strided_slice %48 {offsets = [0, 256], sizes = [8, 128], strides = [1, 1]} : vector<8x512xf32> to vector<8x128xf32>
    %55 = arith.addf %53, %54 : vector<8x128xf32>
    %56 = vector.extract_strided_slice %48 {offsets = [0, 384], sizes = [8, 128], strides = [1, 1]} : vector<8x512xf32> to vector<8x128xf32>
    %57 = arith.addf %55, %56 : vector<8x128xf32>
    %58 = vector.shape_cast %57 : vector<8x128xf32> to vector<1x8x128xf32>
    %c0_13 = arith.constant 0 : index
    %c0_14 = arith.constant 0 : index
    %c0_15 = arith.constant 0 : index
    %59 = vector.load %arg3[%c0_13, %c0_14, %c0_15] : memref<1x8x128xf32, #tpu.memory_space<vmem>>, vector<1x8x128xf32>
    tpu.vector_store %arg3[%c0_13, %c0_14, %c0_15], %58 {strides = array<i32>} : memref<1x8x128xf32, #tpu.memory_space<vmem>>, vector<1x8x128xf32>,
    %60 = vector.extract_strided_slice %50 {offsets = [0, 0], sizes = [8, 128], strides = [1, 1]} : vector<8x512xf32> to vector<8x128xf32>
    %61 = vector.extract_strided_slice %50 {offsets = [0, 128], sizes = [8, 128], strides = [1, 1]} : vector<8x512xf32> to vector<8x128xf32>
    %62 = arith.addf %60, %61 : vector<8x128xf32>
    %63 = vector.extract_strided_slice %50 {offsets = [0, 256], sizes = [8, 128], strides = [1, 1]} : vector<8x512xf32> to vector<8x128xf32>
    %64 = arith.addf %62, %63 : vector<8x128xf32>
    %65 = vector.extract_strided_slice %50 {offsets = [0, 384], sizes = [8, 128], strides = [1, 1]} : vector<8x512xf32> to vector<8x128xf32>
    %66 = arith.addf %64, %65 : vector<8x128xf32>
    %67 = vector.shape_cast %66 : vector<8x128xf32> to vector<1x8x128xf32>
    %c0_16 = arith.constant 0 : index
    %c0_17 = arith.constant 0 : index
    %c0_18 = arith.constant 0 : index
    %68 = vector.load %arg4[%c0_16, %c0_17, %c0_18] : memref<1x8x128xf32, #tpu.memory_space<vmem>>, vector<1x8x128xf32>
    tpu.vector_store %arg4[%c0_16, %c0_17, %c0_18], %67 {strides = array<i32>} : memref<1x8x128xf32, #tpu.memory_space<vmem>>, vector<1x8x128xf32>,
    return
  }
  func.func @transform_0(%arg0: i32) -> (i32, i32) {
    %c0_i32 = arith.constant 0 : i32
    %c0_i32_0 = arith.constant 0 : i32
    return %arg0, %c0_i32 : i32, i32
  }
  func.func @transform_1(%arg0: i32) -> (i32, i32) {
    %c0_i32 = arith.constant 0 : i32
    %c0_i32_0 = arith.constant 0 : i32
    return %arg0, %c0_i32 : i32, i32
  }
  func.func @transform_2(%arg0: i32) -> (i32, i32, i32) {
    %c0_i32 = arith.constant 0 : i32
    %c0_i32_0 = arith.constant 0 : i32
    %c0_i32_1 = arith.constant 0 : i32
    return %arg0, %c0_i32, %c0_i32_0 : i32, i32, i32
  }
  func.func @transform_3(%arg0: i32) -> (i32, i32, i32) {
    %c0_i32 = arith.constant 0 : i32
    %c0_i32_0 = arith.constant 0 : i32
    %c0_i32_1 = arith.constant 0 : i32
    return %arg0, %c0_i32, %c0_i32_0 : i32, i32, i32
  }
}

</mosaic_0001>

<llo_original>
// kernel: tpu_custom_call.1
$region0: #{tpu_custom_call.1}
  #allocation0 [shape = 'u32[]', space=smem, size = 0x4, offset = 0x4, fixed_abs, tag = 'smem constant byte address 0x4 - core index']
  #allocation1 [shape = 'u32[72,128]{1,0:T(1,128)}', space=vmem, size = 0x9000, scoped, tag = 'internal scratch']
  %s0 = inlined_call_operand.hbm [shape: f32[120,512], index: 0, kind: input, shape index: {}]
  %s1 = inlined_call_operand.hbm [shape: f32[120,512], index: 1, kind: input, shape index: {}]
  %s2 = inlined_call_operand.hbm [shape: f32[3,8,128], index: 2, kind: output, shape index: {0}]
  %s3 = inlined_call_operand.hbm [shape: f32[3,8,128], index: 3, kind: output, shape index: {1}]
  %4 = xla_tuple %s2, %s3
  %s5 = sld [smem:[#allocation0]]
  $region57: #{tpu_custom_call.1} parent=0
    _
  %s7 = ssub.s32 1, %s5
  %s8 = scalar_select 0, %s7, %s5
  $region1: #{tpu_custom_call.1} parent=0
    #allocation2 [shape = 'u8[163840]{0}', space=vmem, size = 0x28000, scoped, tag = 'input window, operand 0']
    #allocation3 [shape = 's32[2]{0}', space=sflag, size = 0x8, scoped, tag = 'scoped memory for tpu_custom_call.1']
    #allocation4 [shape = 's32[2]{0}', space=sflag, size = 0x8, scoped, tag = 'scoped memory for tpu_custom_call.1']
    #allocation5 [shape = 'u8[163840]{0}', space=vmem, size = 0x28000, scoped, tag = 'input window, operand 1']
    #allocation6 [shape = 's32[2]{0}', space=sflag, size = 0x8, scoped, tag = 'scoped memory for tpu_custom_call.1']
    #allocation7 [shape = 'u8[8192]{0}', space=vmem, size = 0x2000, scoped, tag = 'output window, operand 0']
    #allocation8 [shape = 'u8[8192]{0}', space=vmem, size = 0x2000, scoped, tag = 'output window, operand 1']
    #allocation9 [shape = 's32[2]{0}', space=sflag, size = 0x8, scoped, tag = 'scoped memory for tpu_custom_call.1']
    %9 = vsyncpa [#allocation3], 0
    %s10 = scalar_lea.sflag [#allocation3], 1
    %11 = vsyncpa %s10, 0
    %12 = vsyncpa [#allocation6], 0
    %s13 = scalar_lea.sflag [#allocation6], 1
    %14 = vsyncpa %s13, 0
    %15 = vsyncpa [#allocation4], 0
    %s16 = scalar_lea.sflag [#allocation4], 1
    %17 = vsyncpa %s16, 0
    %18 = vsyncpa [#allocation9], 0
    %s19 = scalar_lea.sflag [#allocation9], 1
    %20 = vsyncpa %s19, 0
    loop: start=0, step=1, limit=5
    $region2: #{tpu_custom_call.1} parent=1 // loop_pre_header
      _
    $region3: #{tpu_custom_call.1} parent=1 // loop_header
      %s22 = sphi 0, %s26
      %p23 = scmp.ge.s32.totalorder %s22, 5
      %s32 = sphi 0, %s34
      %s35 = sphi 0, %s32
      %s36 = sphi 0, %s35
      %s52 = sphi 0, %s36
      %s58 = sphi 0, %s60
      %s61 = sphi 0, %s58
      %s62 = sphi 0, %s61
      %s78 = sphi 0, %s62
      %s84 = sphi 0, %s86
      %s87 = sphi 0, %s84
      %s88 = sphi 0, %s87
      %s104 = sphi 0, %s88
      %s110 = sphi 0, %s112
      %s113 = sphi 0, %s110
      %s114 = sphi 0, %s113
      %s130 = sphi 0, %s114
    $region4: #{tpu_custom_call.1} parent=1 // loop_header_branch
      %25 = sbr.rel (%p23) target = $region8
    $region5: #{tpu_custom_call.1} parent=1 // loop_body
      %s27 = ssub.s32 %s22, 1
      %s28 = ssub.s32 %s22, 2
      %s29 = sadd.s32 %s22, 1
      %s30 = ssub.s32 %s22, %s29
      %p31 = scmp.eq.s32.totalorder %s30, 0
      %s33 = sadd.s32 %s32, 1
      %s34 = scalar_select %p31, %s32, %s33
      %p37 = pneg %p31
      %p38 = scmp.eq.s32.totalorder %s22, 2
      %p39 = por %p37, %p38
      %p40 = scmp.ne.s32.totalorder %s32, %s35
      %p41 = scmp.eq.s32.totalorder %s22, 0
      %p42 = por %p40, %p41
      %p43 = scmp.ne.s32.totalorder %s32, %s35
      %p44 = scmp.eq.s32.totalorder %s27, 2
      %p45 = por %p43, %p44
      %p46 = scmp.ne.s32.totalorder %s35, %s36
      %p47 = scmp.eq.s32.totalorder %s27, 0
      %p48 = por %p46, %p47
      %p49 = scmp.ne.s32.totalorder %s35, %s36
      %p50 = scmp.eq.s32.totalorder %s28, 2
      %p51 = por %p49, %p50
      %p53 = scmp.ne.s32.totalorder %s36, %s52
      %p54 = scmp.eq.s32.totalorder %s28, 0
      %p55 = por %p53, %p54
      %s56 = ssub.s32 %s22, %s29
      %p57 = scmp.eq.s32.totalorder %s56, 0
      %s59 = sadd.s32 %s58, 1
      %s60 = scalar_select %p57, %s58, %s59
      %p63 = pneg %p57
      %p64 = scmp.eq.s32.totalorder %s22, 2
      %p65 = por %p63, %p64
      %p66 = scmp.ne.s32.totalorder %s58, %s61
      %p67 = scmp.eq.s32.totalorder %s22, 0
      %p68 = por %p66, %p67
      %p69 = scmp.ne.s32.totalorder %s58, %s61
      %p70 = scmp.eq.s32.totalorder %s27, 2
      %p71 = por %p69, %p70
      %p72 = scmp.ne.s32.totalorder %s61, %s62
      %p73 = scmp.eq.s32.totalorder %s27, 0
      %p74 = por %p72, %p73
      %p75 = scmp.ne.s32.totalorder %s61, %s62
      %p76 = scmp.eq.s32.totalorder %s28, 2
      %p77 = por %p75, %p76
      %p79 = scmp.ne.s32.totalorder %s62, %s78
      %p80 = scmp.eq.s32.totalorder %s28, 0
      %p81 = por %p79, %p80
      %s82 = ssub.s32 %s22, %s29
      %p83 = scmp.eq.s32.totalorder %s82, 0
      %s85 = sadd.s32 %s84, 1
      %s86 = scalar_select %p83, %s84, %s85
      %p89 = pneg %p83
      %p90 = scmp.eq.s32.totalorder %s22, 2
      %p91 = por %p89, %p90
      %p92 = scmp.ne.s32.totalorder %s84, %s87
      %p93 = scmp.eq.s32.totalorder %s22, 0
      %p94 = por %p92, %p93
      %p95 = scmp.ne.s32.totalorder %s84, %s87
      %p96 = scmp.eq.s32.totalorder %s27, 2
      %p97 = por %p95, %p96
      %p98 = scmp.ne.s32.totalorder %s87, %s88
      %p99 = scmp.eq.s32.totalorder %s27, 0
      %p100 = por %p98, %p99
      %p101 = scmp.ne.s32.totalorder %s87, %s88
      %p102 = scmp.eq.s32.totalorder %s28, 2
      %p103 = por %p101, %p102
      %p105 = scmp.ne.s32.totalorder %s88, %s104
      %p106 = scmp.eq.s32.totalorder %s28, 0
      %p107 = por %p105, %p106
      %s108 = ssub.s32 %s22, %s29
      %p109 = scmp.eq.s32.totalorder %s108, 0
      %s111 = sadd.s32 %s110, 1
      %s112 = scalar_select %p109, %s110, %s111
      %p115 = pneg %p109
      %p116 = scmp.eq.s32.totalorder %s22, 2
      %p117 = por %p115, %p116
      %p118 = scmp.ne.s32.totalorder %s110, %s113
      %p119 = scmp.eq.s32.totalorder %s22, 0
      %p120 = por %p118, %p119
      %p121 = scmp.ne.s32.totalorder %s110, %s113
      %p122 = scmp.eq.s32.totalorder %s27, 2
      %p123 = por %p121, %p122
      %p124 = scmp.ne.s32.totalorder %s113, %s114
      %p125 = scmp.eq.s32.totalorder %s27, 0
      %p126 = por %p124, %p125
      %p127 = scmp.ne.s32.totalorder %s113, %s114
      %p128 = scmp.eq.s32.totalorder %s28, 2
      %p129 = por %p127, %p128
      %p131 = scmp.ne.s32.totalorder %s114, %s130
      %p132 = scmp.eq.s32.totalorder %s28, 0
      %p133 = por %p131, %p132
      %p134 = scmp.le.s32.totalorder 1, %s22
      %p135 = scmp.lt.s32.totalorder %s22, 4
      %p136 = pnand %p134, %p135
      %p137 = pneg %p136
      // Predicated region
      $region9: #{tpu_custom_call.1} parent=5 // pred_check
        _
      $region10: #{tpu_custom_call.1} parent=5 // pred_check_branch
        %139 = sbr.rel (%p136) target = $region12
      $region11: #{tpu_custom_call.1} parent=5 // pred_region
        %s140 = ssub.s32 %s22, 1
      $region12: #{tpu_custom_call.1} parent=5 // pred_fallthru
        _
      %p141 = scmp.lt.s32.totalorder %s22, 3
      // Predicated region
      $region13: #{tpu_custom_call.1} parent=5 // pred_check
        %p142 = pneg %p141
      $region14: #{tpu_custom_call.1} parent=5 // pred_check_branch
        %144 = sbr.rel (%p142) target = $region16
      $region15: #{tpu_custom_call.1} parent=5 // pred_region
        // Predicated region
        $region17: #{tpu_custom_call.1} parent=15 // pred_check
          %p145 = pneg %p42
        $region18: #{tpu_custom_call.1} parent=15 // pred_check_branch
          %147 = sbr.rel (%p145) target = $region20
        $region19: #{tpu_custom_call.1} parent=15 // pred_region
          %s148 = sand.u32 %s32, 1
          %s149 = scalar_lea.sflag [#allocation3], %s148
          %s150 = sand.u32 %s32, 1
          %s151 = smul.addr %s150, 160
          %s152 = scalar_lea.vmem [#allocation2], %s151
          %s153 = smul.u32 5, %s22
          %155 = vsyncadd %s149, 0
          %s156 = smul.addr %s153, 4
          %s157 = smul.addr %s156, 8
          %s158 = scalar_lea.hbm %s0, %s157
          %s159 = sshll.u32 %s158, 4
          %s160 = int_to_ptr.hbm [resolvable:$true] %s159
          %s161 = sshll.u32 %s152, 4
          %s162 = int_to_ptr.vmem [resolvable:$true] %s161
          %167 = dma.hbm_to_vmem [thread:$0]  %s160, 2560, %s162, %s149, 512, 512, 32
        $region20: #{tpu_custom_call.1} parent=15 // pred_fallthru
          _
        // Predicated region
        $region21: #{tpu_custom_call.1} parent=15 // pred_check
          %p168 = pneg %p68
        $region22: #{tpu_custom_call.1} parent=15 // pred_check_branch
          %170 = sbr.rel (%p168) target = $region24
        $region23: #{tpu_custom_call.1} parent=15 // pred_region
          %s171 = sand.u32 %s58, 1
          %s172 = scalar_lea.sflag [#allocation6], %s171
          %s173 = sand.u32 %s58, 1
          %s174 = smul.addr %s173, 160
          %s175 = scalar_lea.vmem [#allocation5], %s174
          %s176 = smul.u32 5, %s22
          %178 = vsyncadd %s172, 0
          %s179 = smul.addr %s176, 4
          %s180 = smul.addr %s179, 8
          %s181 = scalar_lea.hbm %s1, %s180
          %s182 = sshll.u32 %s181, 4
          %s183 = int_to_ptr.hbm [resolvable:$true] %s182
          %s184 = sshll.u32 %s175, 4
          %s185 = int_to_ptr.vmem [resolvable:$true] %s184
          %190 = dma.hbm_to_vmem [thread:$0]  %s183, 2560, %s185, %s172, 512, 512, 32
        $region24: #{tpu_custom_call.1} parent=15 // pred_fallthru
          _
      $region16: #{tpu_custom_call.1} parent=5 // pred_fallthru
        _
      %p191 = scmp.le.s32.totalorder 1, %s22
      %p192 = scmp.lt.s32.totalorder %s22, 4
      %p193 = pnand %p191, %p192
      %p194 = pneg %p193
      // Predicated region
      $region25: #{tpu_custom_call.1} parent=5 // pred_check
        _
      $region26: #{tpu_custom_call.1} parent=5 // pred_check_branch
        %196 = sbr.rel (%p193) target = $region28
      $region27: #{tpu_custom_call.1} parent=5 // pred_region
        %s197 = ssub.s32 %s22, 1
        %s198 = sand.u32 %s35, 1
        %s199 = scalar_lea.sflag [#allocation3], %s198
        %s200 = sand.u32 %s35, 1
        %s201 = smul.addr %s200, 160
        %s202 = scalar_lea.vmem [#allocation2], %s201
        // Predicated region
        $region29: #{tpu_custom_call.1} parent=27 // pred_check
          %p203 = pneg %p48
        $region30: #{tpu_custom_call.1} parent=27 // pred_check_branch
          %205 = sbr.rel (%p203) target = $region32
        $region31: #{tpu_custom_call.1} parent=27 // pred_region
          %207 = dma.done %s199, 2560
        $region32: #{tpu_custom_call.1} parent=27 // pred_fallthru
          _
        %s208 = sand.u32 %s61, 1
        %s209 = scalar_lea.sflag [#allocation6], %s208
        %s210 = sand.u32 %s61, 1
        %s211 = smul.addr %s210, 160
        %s212 = scalar_lea.vmem [#allocation5], %s211
        // Predicated region
        $region33: #{tpu_custom_call.1} parent=27 // pred_check
          %p213 = pneg %p74
        $region34: #{tpu_custom_call.1} parent=27 // pred_check_branch
          %215 = sbr.rel (%p213) target = $region36
        $region35: #{tpu_custom_call.1} parent=27 // pred_region
          %217 = dma.done %s209, 2560
        $region36: #{tpu_custom_call.1} parent=27 // pred_fallthru
          _
        %s218 = sand.u32 %s35, 1
        %s219 = scalar_lea.sflag [#allocation3], %s218
        %s220 = sand.u32 %s35, 1
        %s221 = smul.addr %s220, 160
        %s222 = scalar_lea.vmem [#allocation2], %s221
        %p223 = pneg %p48
        %p224 = pneg %p45
        %s225 = sand.u32 %s61, 1
        %s226 = scalar_lea.sflag [#allocation6], %s225
        %s227 = sand.u32 %s61, 1
        %s228 = smul.addr %s227, 160
        %s229 = scalar_lea.vmem [#allocation5], %s228
        %p230 = pneg %p74
        %p231 = pneg %p71
        %p232 = pneg %p100
        %p233 = pneg %p97
        %s234 = sand.u32 %s87, 1
        %s235 = scalar_lea.sflag [#allocation4], %s234
        %s236 = sand.u32 %s87, 1
        %s237 = smul.addr %s236, 8
        %s238 = scalar_lea.vmem [#allocation7], %s237
        %p239 = pneg %p126
        %p240 = pneg %p123
        %s241 = sand.u32 %s113, 1
        %s242 = scalar_lea.sflag [#allocation9], %s241
        %s243 = sand.u32 %s113, 1
        %s244 = smul.addr %s243, 8
        %s245 = scalar_lea.vmem [#allocation8], %s244
        %s246 = smul.u32 5, %s27
        %s247 = smul.u32 5, %s27
        %s248 = smul.u32 0, 4
        %s249 = smul.addr %s248, 8
        %s250 = scalar_lea.vmem %s202, %s249 [#allocation2]
        %v251 = vld [vmem:[%s250] sm:$0xff]
        %v252 = vld [vmem:[%s250 + $0x8] sm:$0xff]
        %v253 = vld [vmem:[%s250 + $0x10] sm:$0xff]
        %v254 = vld [vmem:[%s250 + $0x18] sm:$0xff]
        %s255 = smul.addr %s248, 8
        %s256 = scalar_lea.vmem %s212, %s255 [#allocation5]
        %v257 = vld [vmem:[%s256] sm:$0xff]
        %v258 = vld [vmem:[%s256 + $0x8] sm:$0xff]
        %v259 = vld [vmem:[%s256 + $0x10] sm:$0xff]
        %v260 = vld [vmem:[%s256 + $0x18] sm:$0xff]
        %v261 = vmul.f32 %v251, %v257
        %v262 = vmul.f32 %v252, %v258
        %v263 = vmul.f32 %v253, %v259
        %v264 = vmul.f32 %v254, %v260
        %v265 = vadd.f32 %v261, 0.0
        %v266 = vadd.f32 %v262, 0.0
        %v267 = vadd.f32 %v263, 0.0
        %v268 = vadd.f32 %v264, 0.0
        %v269 = vmul.f32 %v257, %v257
        %v270 = vmul.f32 %v258, %v258
        %v271 = vmul.f32 %v259, %v259
        %v272 = vmul.f32 %v260, %v260
        %v273 = vadd.f32 %v269, 0.0
        %v274 = vadd.f32 %v270, 0.0
        %v275 = vadd.f32 %v271, 0.0
        %v276 = vadd.f32 %v272, 0.0
        %s277 = smul.u32 1, 4
        %s278 = smul.addr %s277, 8
        %s279 = scalar_lea.vmem %s202, %s278 [#allocation2]
        %v280 = vld [vmem:[%s279] sm:$0xff]
        %v281 = vld [vmem:[%s279 + $0x8] sm:$0xff]
        %v282 = vld [vmem:[%s279 + $0x10] sm:$0xff]
        %v283 = vld [vmem:[%s279 + $0x18] sm:$0xff]
        %s284 = smul.addr %s277, 8
        %s285 = scalar_lea.vmem %s212, %s284 [#allocation5]
        %v286 = vld [vmem:[%s285] sm:$0xff]
        %v287 = vld [vmem:[%s285 + $0x8] sm:$0xff]
        %v288 = vld [vmem:[%s285 + $0x10] sm:$0xff]
        %v289 = vld [vmem:[%s285 + $0x18] sm:$0xff]
        %v290 = vmul.f32 %v280, %v286
        %v291 = vmul.f32 %v281, %v287
        %v292 = vmul.f32 %v282, %v288
        %v293 = vmul.f32 %v283, %v289
        %v294 = vadd.f32 %v265, %v290
        %v295 = vadd.f32 %v266, %v291
        %v296 = vadd.f32 %v267, %v292
        %v297 = vadd.f32 %v268, %v293
        %v298 = vmul.f32 %v286, %v286
        %v299 = vmul.f32 %v287, %v287
        %v300 = vmul.f32 %v288, %v288
        %v301 = vmul.f32 %v289, %v289
        %v302 = vadd.f32 %v273, %v298
        %v303 = vadd.f32 %v274, %v299
        %v304 = vadd.f32 %v275, %v300
        %v305 = vadd.f32 %v276, %v301
        %s306 = smul.u32 2, 4
        %s307 = smul.addr %s306, 8
        %s308 = scalar_lea.vmem %s202, %s307 [#allocation2]
        %v309 = vld [vmem:[%s308] sm:$0xff]
        %v310 = vld [vmem:[%s308 + $0x8] sm:$0xff]
        %v311 = vld [vmem:[%s308 + $0x10] sm:$0xff]
        %v312 = vld [vmem:[%s308 + $0x18] sm:$0xff]
        %s313 = smul.addr %s306, 8
        %s314 = scalar_lea.vmem %s212, %s313 [#allocation5]
        %v315 = vld [vmem:[%s314] sm:$0xff]
        %v316 = vld [vmem:[%s314 + $0x8] sm:$0xff]
        %v317 = vld [vmem:[%s314 + $0x10] sm:$0xff]
        %v318 = vld [vmem:[%s314 + $0x18] sm:$0xff]
        %v319 = vmul.f32 %v309, %v315
        %v320 = vmul.f32 %v310, %v316
        %v321 = vmul.f32 %v311, %v317
        %v322 = vmul.f32 %v312, %v318
        %v323 = vadd.f32 %v294, %v319
        %v324 = vadd.f32 %v295, %v320
        %v325 = vadd.f32 %v296, %v321
        %v326 = vadd.f32 %v297, %v322
        %v327 = vmul.f32 %v315, %v315
        %v328 = vmul.f32 %v316, %v316
        %v329 = vmul.f32 %v317, %v317
        %v330 = vmul.f32 %v318, %v318
        %v331 = vadd.f32 %v302, %v327
        %v332 = vadd.f32 %v303, %v328
        %v333 = vadd.f32 %v304, %v329
        %v334 = vadd.f32 %v305, %v330
        %s335 = smul.u32 3, 4
        %s336 = smul.addr %s335, 8
        %s337 = scalar_lea.vmem %s202, %s336 [#allocation2]
        %v338 = vld [vmem:[%s337] sm:$0xff]
        %v339 = vld [vmem:[%s337 + $0x8] sm:$0xff]
        %v340 = vld [vmem:[%s337 + $0x10] sm:$0xff]
        %v341 = vld [vmem:[%s337 + $0x18] sm:$0xff]
        %s342 = smul.addr %s335, 8
        %s343 = scalar_lea.vmem %s212, %s342 [#allocation5]
        %v344 = vld [vmem:[%s343] sm:$0xff]
        %v345 = vld [vmem:[%s343 + $0x8] sm:$0xff]
        %v346 = vld [vmem:[%s343 + $0x10] sm:$0xff]
        %v347 = vld [vmem:[%s343 + $0x18] sm:$0xff]
        %v348 = vmul.f32 %v338, %v344
        %v349 = vmul.f32 %v339, %v345
        %v350 = vmul.f32 %v340, %v346
        %v351 = vmul.f32 %v341, %v347
        %v352 = vadd.f32 %v323, %v348
        %v353 = vadd.f32 %v324, %v349
        %v354 = vadd.f32 %v325, %v350
        %v355 = vadd.f32 %v326, %v351
        %v356 = vmul.f32 %v344, %v344
        %v357 = vmul.f32 %v345, %v345
        %v358 = vmul.f32 %v346, %v346
        %v359 = vmul.f32 %v347, %v347
        %v360 = vadd.f32 %v331, %v356
        %v361 = vadd.f32 %v332, %v357
        %v362 = vadd.f32 %v333, %v358
        %v363 = vadd.f32 %v334, %v359
        %s364 = smul.u32 4, 4
        %s365 = smul.addr %s364, 8
        %s366 = scalar_lea.vmem %s202, %s365 [#allocation2]
        %v367 = vld [vmem:[%s366] sm:$0xff]
        %v368 = vld [vmem:[%s366 + $0x8] sm:$0xff]
        %v369 = vld [vmem:[%s366 + $0x10] sm:$0xff]
        %v370 = vld [vmem:[%s366 + $0x18] sm:$0xff]
        %s371 = smul.addr %s364, 8
        %s372 = scalar_lea.vmem %s212, %s371 [#allocation5]
        %v373 = vld [vmem:[%s372] sm:$0xff]
        %v374 = vld [vmem:[%s372 + $0x8] sm:$0xff]
        %v375 = vld [vmem:[%s372 + $0x10] sm:$0xff]
        %v376 = vld [vmem:[%s372 + $0x18] sm:$0xff]
        %v377 = vmul.f32 %v367, %v373
        %v378 = vmul.f32 %v368, %v374
        %v379 = vmul.f32 %v369, %v375
        %v380 = vmul.f32 %v370, %v376
        %v381 = vadd.f32 %v352, %v377
        %v382 = vadd.f32 %v353, %v378
        %v383 = vadd.f32 %v354, %v379
        %v384 = vadd.f32 %v355, %v380
        %v385 = vmul.f32 %v373, %v373
        %v386 = vmul.f32 %v374, %v374
        %v387 = vmul.f32 %v375, %v375
        %v388 = vmul.f32 %v376, %v376
        %v389 = vadd.f32 %v360, %v385
        %v390 = vadd.f32 %v361, %v386
        %v391 = vadd.f32 %v362, %v387
        %v392 = vadd.f32 %v363, %v388
        %v393 = vadd.f32 %v381, %v382
        %v394 = vadd.f32 %v393, %v383
        %v395 = vadd.f32 %v394, %v384
        %396 = vst [vmem:[%s238] sm:$0xff] %v395
        %v397 = vadd.f32 %v389, %v390
        %v398 = vadd.f32 %v397, %v391
        %v399 = vadd.f32 %v398, %v392
        %400 = vst [vmem:[%s245] sm:$0xff] %v399
        %s401 = sand.u32 %s87, 1
        %s402 = scalar_lea.sflag [#allocation4], %s401
        %s403 = sand.u32 %s87, 1
        %s404 = smul.addr %s403, 8
        %s405 = scalar_lea.vmem [#allocation7], %s404
        %s406 = sand.u32 %s113, 1
        %s407 = scalar_lea.sflag [#allocation9], %s406
        %s408 = sand.u32 %s113, 1
        %s409 = smul.addr %s408, 8
        %s410 = scalar_lea.vmem [#allocation8], %s409
        // Predicated region
        $region37: #{tpu_custom_call.1} parent=27 // pred_check
          %p411 = pneg %p97
        $region38: #{tpu_custom_call.1} parent=27 // pred_check_branch
          %413 = sbr.rel (%p411) target = $region40
        $region39: #{tpu_custom_call.1} parent=27 // pred_region
          %415 = vsyncadd %s402, 0
          %s416 = smul.addr %s27, 8
          %s417 = scalar_lea.hbm %s2, %s416
          %s419 = sshll.u32 %s405, 4
          %s420 = int_to_ptr.vmem [resolvable:$true] %s419
          %s421 = sshll.u32 %s417, 4
          %s422 = int_to_ptr.hbm [resolvable:$true] %s421
          %424 = dma.vmem_to_hbm [thread:$0]  %s420, 128, %s422, %s402
        $region40: #{tpu_custom_call.1} parent=27 // pred_fallthru
          _
        // Predicated region
        $region41: #{tpu_custom_call.1} parent=27 // pred_check
          %p425 = pneg %p123
        $region42: #{tpu_custom_call.1} parent=27 // pred_check_branch
          %427 = sbr.rel (%p425) target = $region44
        $region43: #{tpu_custom_call.1} parent=27 // pred_region
          %429 = vsyncadd %s407, 0
          %s430 = smul.addr %s27, 8
          %s431 = scalar_lea.hbm %s3, %s430
          %s433 = sshll.u32 %s410, 4
          %s434 = int_to_ptr.vmem [resolvable:$true] %s433
          %s435 = sshll.u32 %s431, 4
          %s436 = int_to_ptr.hbm [resolvable:$true] %s435
          %438 = dma.vmem_to_hbm [thread:$0]  %s434, 128, %s436, %s407
        $region44: #{tpu_custom_call.1} parent=27 // pred_fallthru
          _
      $region28: #{tpu_custom_call.1} parent=5 // pred_fallthru
        _
      %p439 = scmp.le.s32.totalorder 2, %s22
      // Predicated region
      $region45: #{tpu_custom_call.1} parent=5 // pred_check
        %p440 = pneg %p439
      $region46: #{tpu_custom_call.1} parent=5 // pred_check_branch
        %442 = sbr.rel (%p440) target = $region48
      $region47: #{tpu_custom_call.1} parent=5 // pred_region
        %s443 = ssub.s32 %s22, 2
        // Predicated region
        $region49: #{tpu_custom_call.1} parent=47 // pred_check
          %p444 = pneg %p103
        $region50: #{tpu_custom_call.1} parent=47 // pred_check_branch
          %446 = sbr.rel (%p444) target = $region52
        $region51: #{tpu_custom_call.1} parent=47 // pred_region
          %s447 = sand.u32 %s88, 1
          %s448 = scalar_lea.sflag [#allocation4], %s447
          %s449 = sand.u32 %s88, 1
          %s450 = smul.addr %s449, 8
          %s451 = scalar_lea.vmem [#allocation7], %s450
          %453 = dma.done %s448, 128
        $region52: #{tpu_custom_call.1} parent=47 // pred_fallthru
          _
        // Predicated region
        $region53: #{tpu_custom_call.1} parent=47 // pred_check
          %p454 = pneg %p129
        $region54: #{tpu_custom_call.1} parent=47 // pred_check_branch
          %456 = sbr.rel (%p454) target = $region56
        $region55: #{tpu_custom_call.1} parent=47 // pred_region
          %s457 = sand.u32 %s114, 1
          %s458 = scalar_lea.sflag [#allocation9], %s457
          %s459 = sand.u32 %s114, 1
          %s460 = smul.addr %s459, 8
          %s461 = scalar_lea.vmem [#allocation8], %s460
          %463 = dma.done %s458, 128
        $region56: #{tpu_custom_call.1} parent=47 // pred_fallthru
          _
      $region48: #{tpu_custom_call.1} parent=5 // pred_fallthru
        _
    $region6: #{tpu_custom_call.1} parent=1 // loop_footer
      %s26 = sadd.s32 1, %s22
    $region7: #{tpu_custom_call.1} parent=1 // loop_footer_branch
      %21 = sbr.rel target = $region3
    $region8: #{tpu_custom_call.1} parent=1 // loop_exit
      _
    %464 = vsyncpa [#allocation3], 1
    %s465 = scalar_lea.sflag [#allocation3], 1
    %466 = vsyncpa %s465, 1
    %467 = vsyncpa [#allocation6], 1
    %s468 = scalar_lea.sflag [#allocation6], 1
    %469 = vsyncpa %s468, 1
    %470 = vsyncpa [#allocation4], 1
    %s471 = scalar_lea.sflag [#allocation4], 1
    %472 = vsyncpa %s471, 1
    %473 = vsyncpa [#allocation9], 1
    %s474 = scalar_lea.sflag [#allocation9], 1
    %475 = vsyncpa %s474, 1

</llo_original>
